<compile_context>
chip_gen: v6e
topology: v6e:2x2x1
jax: 0.10.0
libtpu: 0.0.40
codegen_flags: <defaults>
</compile_context>

<pallas_src>
import jax
import jax.numpy as jnp
from jax import lax
from jax.experimental import pallas as pl
from jax.experimental.pallas import tpu as pltpu


def ca_kernel(gamma_ref, x_ref, o_ref):
    # gamma_ref: (1,) f32 in SMEM; x_ref block: (Bb, C, HW) in the input dtype.
    x = x_ref[...]                                          # (Bb, C, HW)

    # energy[b,c,d] = sum_hw x[b,c,hw] * x[b,d,hw]  -- batched MXU matmul contracting lanes,
    # native-dtype inputs, f32 accumulation.
    energy = jnp.einsum("bcx,bdx->bcd", x, x,
                        preferred_element_type=jnp.float32)  # (Bb, C, C) f32

    # softmax(rowmax - energy) is shift-invariant => softmax(-energy); shifting by the
    # row minimum keeps all exponents <= 0 (identical to the stable-softmax reference).
    row_min = jnp.min(energy, axis=-1, keepdims=True)
    p = jnp.exp(row_min - energy)
    inv = pl.reciprocal(jnp.sum(p, axis=-1, keepdims=True), approx=True)
    attn = (p * inv).astype(x.dtype)                        # (Bb, C, C), MXU-native dtype

    # out = attn @ x : (Bb, C, C) @ (Bb, C, HW) -> (Bb, C, HW), lane-dense result.
    out = jnp.einsum("bcd,bdx->bcx", attn, x,
                     preferred_element_type=jnp.float32)    # f32

    gamma = gamma_ref[0]
    # Only `out` is live in f32; residual uses original-dtype x.
    o_ref[...] = (gamma * out).astype(o_ref.dtype) + x


def ca_block(x_nchw, gamma):
    """x_nchw: (B, C, H, W). gamma: scalar (PyTorch nn.Parameter of shape (1,))."""
    B, C, H, W = x_nchw.shape
    HW = H * W

    # NCHW -> (B, C, HW) is a pure reshape (free).
    x = x_nchw.reshape(B, C, HW)

    # Pad HW up to a multiple of 128 for lane-dense stores. Zero columns add nothing to
    # the Gram matrix and are sliced off the output, so this is exact.
    HW_pad = ((HW + 127) // 128) * 128
    if HW_pad != HW:
        x = jnp.pad(x, ((0, 0), (0, 0), (0, HW_pad - HW)))

    gamma_arr = jnp.asarray(gamma, dtype=jnp.float32).reshape(1)

    # Images per grid step: big enough to amortize per-step overhead, small enough to
    # double-buffer comfortably, and keep >=2 grid steps (when B allows) so both v7x
    # TensorCores get balanced work on the "parallel" batch axis.
    itemsize = jnp.dtype(x.dtype).itemsize
    per_img = C * HW_pad * itemsize
    budget = 4 << 20                                   # ~4 MiB of x per block
    bb = max(1, min(B, budget // max(per_img, 1)))
    if B >= 2:
        bb = min(bb, max(1, B // 2))                   # keep >=2 grid steps
    while B % bb != 0:                                 # evenly dividing batch tile
        bb -= 1
    grid = (B // bb,)

    # VMEM sizing: 2x double-buffered input + output blocks, plus f32 intermediates
    # (energy/attn CxC and the f32 `out` slab). Cap at 64 MiB (v7x physical VMEM).
    block_bytes = bb * C * HW_pad * itemsize
    f32_work = bb * C * HW_pad * 4 + 2 * bb * C * C * 4
    vmem_limit = int(min(64 << 20, max(16 << 20, 4 * block_bytes + f32_work + (2 << 20))))

    # TODO(synk): very large feature maps (e.g. C=256 at 128x128 spatial) need a two-phase
    # HW-tiled grid (accumulate the CxC Gram over HW tiles with pl.when init/finalize, then
    # apply attn tile-by-tile) to stay under v7x's 64 MiB VMEM; the monolithic per-image
    # block used here is fine below that regime.
    out = pl.pallas_call(
        ca_kernel,
        out_shape=jax.ShapeDtypeStruct((B, C, HW_pad), x_nchw.dtype),
        grid_spec=pltpu.PrefetchScalarGridSpec(
            num_scalar_prefetch=0,
            grid=grid,
            in_specs=[
                pl.BlockSpec(memory_space=pltpu.MemorySpace.SMEM),    # gamma scalar
                pl.BlockSpec((bb, C, HW_pad), lambda b: (b, 0, 0)),   # x tile
            ],
            out_specs=pl.BlockSpec((bb, C, HW_pad), lambda b: (b, 0, 0)),
        ),
        compiler_params=pltpu.CompilerParams(
            dimension_semantics=("parallel",),
            vmem_limit_bytes=vmem_limit,
        ),
    )(gamma_arr, x)

    if HW_pad != HW:
        out = out[:, :, :HW]
    return out.reshape(B, C, H, W)


def ca_reference(x_nchw, gamma):
    # Pure-JAX reference mirroring the PyTorch math (HIGHEST precision).
    B, C, H, W = x_nchw.shape
    q = x_nchw.reshape(B, C, H * W).astype(jnp.float32)
    energy = jnp.einsum("bci,bdi->bcd", q, q, precision=lax.Precision.HIGHEST)
    energy_new = jnp.max(energy, axis=-1, keepdims=True) - energy
    attn = jax.nn.softmax(energy_new, axis=-1)
    out = jnp.einsum("bcd,bdi->bci", attn, q,
                     precision=lax.Precision.HIGHEST).reshape(B, C, H, W)
    return gamma * out + x_nchw


if __name__ == "__main__":
    B, C, H, W = 2, 64, 16, 16

    key = jax.random.PRNGKey(0)
    kx, _ = jax.random.split(key)
    x = 0.5 * jax.random.normal(kx, (B, C, H, W), dtype=jnp.float32)
    # The PyTorch module initialises gamma to 0 (identity block); use a nonzero value
    # so the attention path is actually exercised.
    gamma = 0.5

    out = ca_block(x, gamma)
    out = jax.block_until_ready(out)

    ref = ca_reference(x, gamma)
    assert out.shape == (B, C, H, W)
    assert jnp.allclose(out, ref, atol=3e-3, rtol=3e-3), "mismatch vs reference"

    print("KERNEL_OK")
</pallas_src>

<mosaic_0001>
module attributes {stable_mosaic.version = 11 : i64} {
  func.func @ca_kernel(%arg0: i32, %arg1: memref<1xf32, #tpu.memory_space<smem>>, %arg2: memref<1x64x256xf32, #tpu.memory_space<vmem>>, %arg3: memref<1x64x256xf32, #tpu.memory_space<vmem>>) attributes {dimension_semantics = [#tpu.dimension_semantics<parallel>], iteration_bounds = array<i64: 2>, scalar_prefetch = 0 : i64, scratch_operands = 0 : i64, tpu.core_type = #tpu.core_type<tc>, window_params = [{transform_indices = @transform_0, window_bounds = array<i64: 1>}, {transform_indices = @transform_1, window_bounds = array<i64: 1, 64, 256>}, {transform_indices = @transform_2, window_bounds = array<i64: 1, 64, 256>}]} {
    %c0 = arith.constant 0 : index
    %c0_0 = arith.constant 0 : index
    %c0_1 = arith.constant 0 : index
    %0 = vector.load %arg2[%c0, %c0_0, %c0_1] : memref<1x64x256xf32, #tpu.memory_space<vmem>>, vector<1x64x256xf32>
    "tpu.trace_start"() <{level = 10 : i32, message = "bcx,bdx->bcd"}> : () -> ()
    %cst = arith.constant dense<0.000000e+00> : vector<1x64x64xf32>
    %1 = tpu.matmul %0, %0, %cst {dimension_numbers = #tpu.dot_dimension_numbers<[2], [2], [1], [1], [0, 0, 0, 1, 1, 1], [0], [0]>} : vector<1x64x256xf32>, vector<1x64x256xf32>, vector<1x64x64xf32> -> vector<1x64x64xf32>
    "tpu.trace_stop"() : () -> ()
    %cst_2 = arith.constant dense<0x7F800000> : vector<1x64xf32>
    %2 = vector.multi_reduction <minimumf>, %1, %cst_2 [2] : vector<1x64x64xf32> to vector<1x64xf32>
    %3 = vector.shape_cast %2 : vector<1x64xf32> to vector<1x64x1xf32>
    %4 = vector.broadcast %3 : vector<1x64x1xf32> to vector<1x64x64xf32>
    %5 = arith.subf %4, %1 : vector<1x64x64xf32>
    %6 = math.exp %5 : vector<1x64x64xf32>
    %cst_3 = arith.constant dense<0.000000e+00> : vector<1x64xf32>
    %7 = vector.multi_reduction <add>, %6, %cst_3 [2] : vector<1x64x64xf32> to vector<1x64xf32>
    %8 = vector.shape_cast %7 : vector<1x64xf32> to vector<1x64x1xf32>
    %9 = tpu.reciprocal %8 {approx = true} : vector<1x64x1xf32> -> vector<1x64x1xf32>
    %10 = vector.broadcast %9 : vector<1x64x1xf32> to vector<1x64x64xf32>
    %11 = arith.mulf %6, %10 : vector<1x64x64xf32>
    "tpu.trace_start"() <{level = 10 : i32, message = "bcd,bdx->bcx"}> : () -> ()
    %cst_4 = arith.constant dense<0.000000e+00> : vector<1x64x256xf32>
    %12 = tpu.matmul %11, %0, %cst_4 {dimension_numbers = #tpu.dot_dimension_numbers<[2], [1], [1], [2], [0, 0, 0, 1, 1, 2], [0], [0]>} : vector<1x64x64xf32>, vector<1x64x256xf32>, vector<1x64x256xf32> -> vector<1x64x256xf32>
    "tpu.trace_stop"() : () -> ()
    %c0_5 = arith.constant 0 : index
    %13 = memref.load %arg1[%c0_5] : memref<1xf32, #tpu.memory_space<smem>>
    %14 = vector.broadcast %13 : f32 to vector<1x64x256xf32>
    %15 = arith.mulf %14, %12 : vector<1x64x256xf32>
    %16 = arith.addf %15, %0 : vector<1x64x256xf32>
    %c0_6 = arith.constant 0 : index
    %c0_7 = arith.constant 0 : index
    %c0_8 = arith.constant 0 : index
    %17 = vector.load %arg3[%c0_6, %c0_7, %c0_8] : memref<1x64x256xf32, #tpu.memory_space<vmem>>, vector<1x64x256xf32>
    tpu.vector_store %arg3[%c0_6, %c0_7, %c0_8], %16 {strides = array<i32>} : memref<1x64x256xf32, #tpu.memory_space<vmem>>, vector<1x64x256xf32>,
    return
  }
  func.func @transform_0(%arg0: i32) -> i32 {
    %c0_i32 = arith.constant 0 : i32
    %c0_i32_0 = arith.constant 0 : i32
    return %c0_i32 : i32
  }
  func.func @transform_1(%arg0: i32) -> (i32, i32, i32) {
    %c0_i32 = arith.constant 0 : i32
    %c0_i32_0 = arith.constant 0 : i32
    %c0_i32_1 = arith.constant 0 : i32
    return %arg0, %c0_i32, %c0_i32_0 : i32, i32, i32
  }
  func.func @transform_2(%arg0: i32) -> (i32, i32, i32) {
    %c0_i32 = arith.constant 0 : i32
    %c0_i32_0 = arith.constant 0 : i32
    %c0_i32_1 = arith.constant 0 : i32
    return %arg0, %c0_i32, %c0_i32_0 : i32, i32, i32
  }
}

</mosaic_0001>

<llo_original>
// kernel: tpu_custom_call.1
$region0: #{tpu_custom_call.1}
  #allocation0 [shape = 'u32[]', space=smem, size = 0x4, offset = 0x4, fixed_abs, tag = 'smem constant byte address 0x4 - core index']
  #allocation1 [shape = 'u32[144,128]{1,0:T(1,128)}', space=vmem, size = 0x12000, scoped, tag = 'internal scratch']
  #allocation2 [shape = 'f32[1]{0:T(128)S(6)}', space=smem, size = 0x200, scoped, tag = 'scoped memory for tpu_custom_call.1']
  %s0 = inlined_call_operand.<no memory space> [shape: f32[1], index: 0, kind: input, shape index: {}]
  %s1 = inlined_call_operand.hbm [shape: f32[2,64,256], index: 1, kind: input, shape index: {}]
  %s2 = inlined_call_operand.hbm [shape: f32[2,64,256], index: 2, kind: output, shape index: {}]
  %s3 = sld [smem:[#allocation0]]
  $region45: #{tpu_custom_call.1} parent=0
    _
  %s5 = ssub.s32 1, %s3
  %s6 = scalar_select 0, %s5, %s3
  %7 = sst [smem:[#allocation2]] %s0
  $region1: #{tpu_custom_call.1} parent=0
    #allocation3 [shape = 'u8[131072]{0}', space=vmem, size = 0x20000, scoped, tag = 'input window, operand 1']
    #allocation4 [shape = 's32[2]{0}', space=sflag, size = 0x8, scoped, tag = 'scoped memory for tpu_custom_call.1']
    #allocation5 [shape = 's32[2]{0}', space=sflag, size = 0x8, scoped, tag = 'scoped memory for tpu_custom_call.1']
    #allocation6 [shape = 'u8[131072]{0}', space=vmem, size = 0x20000, scoped, tag = 'output window, operand 0']
    %8 = vsyncpa [#allocation4], 0
    %s9 = scalar_lea.sflag [#allocation4], 1
    %10 = vsyncpa %s9, 0
    %11 = vsyncpa [#allocation5], 0
    %s12 = scalar_lea.sflag [#allocation5], 1
    %13 = vsyncpa %s12, 0
    loop: start=0, step=1, limit=4
    $region2: #{tpu_custom_call.1} parent=1 // loop_pre_header
      _
    $region3: #{tpu_custom_call.1} parent=1 // loop_header
      %s15 = sphi 0, %s19
      %p16 = scmp.ge.s32.totalorder %s15, 4
      %s23 = sphi 0, %s23
      %s25 = sphi 0, %s23
      %s26 = sphi 0, %s25
      %s40 = sphi 0, %s26
      %s46 = sphi 0, %s48
      %s49 = sphi 0, %s46
      %s50 = sphi 0, %s49
      %s66 = sphi 0, %s50
      %s72 = sphi 0, %s74
      %s75 = sphi 0, %s72
      %s76 = sphi 0, %s75
      %s92 = sphi 0, %s76
    $region4: #{tpu_custom_call.1} parent=1 // loop_header_branch
      %18 = sbr.rel (%p16) target = $region8
    $region5: #{tpu_custom_call.1} parent=1 // loop_body
      %s20 = ssub.s32 %s15, 1
      %s21 = ssub.s32 %s15, 2
      %s22 = sadd.s32 %s15, 1
      %s24 = sadd.s32 %s23, 1
      %p27 = scmp.eq.s32.totalorder %s15, 1
      %p28 = scmp.ne.s32.totalorder %s23, %s25
      %p29 = scmp.eq.s32.totalorder %s15, 0
      %p30 = por %p28, %p29
      %p31 = scmp.ne.s32.totalorder %s23, %s25
      %p32 = scmp.eq.s32.totalorder %s20, 1
      %p33 = por %p31, %p32
      %p34 = scmp.ne.s32.totalorder %s25, %s26
      %p35 = scmp.eq.s32.totalorder %s20, 0
      %p36 = por %p34, %p35
      %p37 = scmp.ne.s32.totalorder %s25, %s26
      %p38 = scmp.eq.s32.totalorder %s21, 1
      %p39 = por %p37, %p38
      %p41 = scmp.ne.s32.totalorder %s26, %s40
      %p42 = scmp.eq.s32.totalorder %s21, 0
      %p43 = por %p41, %p42
      %s44 = ssub.s32 %s15, %s22
      %p45 = scmp.eq.s32.totalorder %s44, 0
      %s47 = sadd.s32 %s46, 1
      %s48 = scalar_select %p45, %s46, %s47
      %p51 = pneg %p45
      %p52 = scmp.eq.s32.totalorder %s15, 1
      %p53 = por %p51, %p52
      %p54 = scmp.ne.s32.totalorder %s46, %s49
      %p55 = scmp.eq.s32.totalorder %s15, 0
      %p56 = por %p54, %p55
      %p57 = scmp.ne.s32.totalorder %s46, %s49
      %p58 = scmp.eq.s32.totalorder %s20, 1
      %p59 = por %p57, %p58
      %p60 = scmp.ne.s32.totalorder %s49, %s50
      %p61 = scmp.eq.s32.totalorder %s20, 0
      %p62 = por %p60, %p61
      %p63 = scmp.ne.s32.totalorder %s49, %s50
      %p64 = scmp.eq.s32.totalorder %s21, 1
      %p65 = por %p63, %p64
      %p67 = scmp.ne.s32.totalorder %s50, %s66
      %p68 = scmp.eq.s32.totalorder %s21, 0
      %p69 = por %p67, %p68
      %s70 = ssub.s32 %s15, %s22
      %p71 = scmp.eq.s32.totalorder %s70, 0
      %s73 = sadd.s32 %s72, 1
      %s74 = scalar_select %p71, %s72, %s73
      %p77 = pneg %p71
      %p78 = scmp.eq.s32.totalorder %s15, 1
      %p79 = por %p77, %p78
      %p80 = scmp.ne.s32.totalorder %s72, %s75
      %p81 = scmp.eq.s32.totalorder %s15, 0
      %p82 = por %p80, %p81
      %p83 = scmp.ne.s32.totalorder %s72, %s75
      %p84 = scmp.eq.s32.totalorder %s20, 1
      %p85 = por %p83, %p84
      %p86 = scmp.ne.s32.totalorder %s75, %s76
      %p87 = scmp.eq.s32.totalorder %s20, 0
      %p88 = por %p86, %p87
      %p89 = scmp.ne.s32.totalorder %s75, %s76
      %p90 = scmp.eq.s32.totalorder %s21, 1
      %p91 = por %p89, %p90
      %p93 = scmp.ne.s32.totalorder %s76, %s92
      %p94 = scmp.eq.s32.totalorder %s21, 0
      %p95 = por %p93, %p94
      %p96 = scmp.le.s32.totalorder 1, %s15
      %p97 = scmp.lt.s32.totalorder %s15, 3
      %p98 = pnand %p96, %p97
      %p99 = pneg %p98
      // Predicated region
      $region9: #{tpu_custom_call.1} parent=5 // pred_check
        _
      $region10: #{tpu_custom_call.1} parent=5 // pred_check_branch
        %101 = sbr.rel (%p98) target = $region12
      $region11: #{tpu_custom_call.1} parent=5 // pred_region
        %s102 = ssub.s32 %s15, 1
        // Predicated region
        $region13: #{tpu_custom_call.1} parent=11 // pred_check
          %p103 = pneg %p36
        $region14: #{tpu_custom_call.1} parent=11 // pred_check_branch
          %105 = sbr.rel (%p103) target = $region16
        $region15: #{tpu_custom_call.1} parent=11 // pred_region
          _
        $region16: #{tpu_custom_call.1} parent=11 // pred_fallthru
          _
      $region12: #{tpu_custom_call.1} parent=5 // pred_fallthru
        _
      %p106 = scmp.lt.s32.totalorder %s15, 2
      // Predicated region
      $region17: #{tpu_custom_call.1} parent=5 // pred_check
        %p107 = pneg %p106
      $region18: #{tpu_custom_call.1} parent=5 // pred_check_branch
        %109 = sbr.rel (%p107) target = $region20
      $region19: #{tpu_custom_call.1} parent=5 // pred_region
        // Predicated region
        $region21: #{tpu_custom_call.1} parent=19 // pred_check
          %p110 = pneg %p56
        $region22: #{tpu_custom_call.1} parent=19 // pred_check_branch
          %112 = sbr.rel (%p110) target = $region24
        $region23: #{tpu_custom_call.1} parent=19 // pred_region
          %s113 = sand.u32 %s46, 1
          %s114 = scalar_lea.sflag [#allocation4], %s113
          %s115 = sand.u32 %s46, 1
          %s116 = smul.addr %s115, 128
          %s117 = scalar_lea.vmem [#allocation3], %s116
          %s119 = ssub.s32 2048, 2048
          %120 = vsyncadd %s114, %s119
          %s121 = smul.addr %s15, 16
          %s122 = smul.addr %s121, 128
          %s123 = scalar_lea.hbm %s1, %s122
          %s124 = sshll.u32 %s117, 4
          %s125 = int_to_ptr.vmem [resolvable:$true] %s124
          %130 = dma.hbm_to_vmem [thread:$0]  %s123, 2048, %s125, %s114, 256, 256, 16
        $region24: #{tpu_custom_call.1} parent=19 // pred_fallthru
          _
      $region20: #{tpu_custom_call.1} parent=5 // pred_fallthru
        _
      %p131 = scmp.le.s32.totalorder 1, %s15
      %p132 = scmp.lt.s32.totalorder %s15, 3
      %p133 = pnand %p131, %p132
      %p134 = pneg %p133
      // Predicated region
      $region25: #{tpu_custom_call.1} parent=5 // pred_check
        _
      $region26: #{tpu_custom_call.1} parent=5 // pred_check_branch
        %136 = sbr.rel (%p133) target = $region28
      $region27: #{tpu_custom_call.1} parent=5 // pred_region
        %s137 = ssub.s32 %s15, 1
        %s138 = sand.u32 %s49, 1
        %s139 = scalar_lea.sflag [#allocation4], %s138
        %s140 = sand.u32 %s49, 1
        %s141 = smul.addr %s140, 128
        %s142 = scalar_lea.vmem [#allocation3], %s141
        // Predicated region
        $region29: #{tpu_custom_call.1} parent=27 // pred_check
          %p143 = pneg %p62
        $region30: #{tpu_custom_call.1} parent=27 // pred_check_branch
          %145 = sbr.rel (%p143) target = $region32
        $region31: #{tpu_custom_call.1} parent=27 // pred_region
          %146 = dma.done %s139, 2048
        $region32: #{tpu_custom_call.1} parent=27 // pred_fallthru
          _
        %p147 = pneg %p36
        %p148 = pneg %p33
        %s149 = sand.u32 %s49, 1
        %s150 = scalar_lea.sflag [#allocation4], %s149
        %s151 = sand.u32 %s49, 1
        %s152 = smul.addr %s151, 128
        %s153 = scalar_lea.vmem [#allocation3], %s152
        %p154 = pneg %p62
        %p155 = pneg %p59
        %p156 = pneg %p88
        %p157 = pneg %p85
        %s158 = sand.u32 %s75, 1
        %s159 = scalar_lea.sflag [#allocation5], %s158
        %s160 = sand.u32 %s75, 1
        %s161 = smul.addr %s160, 128
        %s162 = scalar_lea.vmem [#allocation6], %s161
        %v163 = vld [vmem:[%s142] sm:$0xff]
        %v164 = vld [vmem:[%s142 + $0x8] sm:$0xff]
        %v165 = vld [vmem:[%s142 + $0x10] sm:$0xff]
        %v166 = vld [vmem:[%s142 + $0x18] sm:$0xff]
        %v167 = vld [vmem:[%s142 + $0x20] sm:$0xff]
        %v168 = vld [vmem:[%s142 + $0x28] sm:$0xff]
        %v169 = vld [vmem:[%s142 + $0x30] sm:$0xff]
        %v170 = vld [vmem:[%s142 + $0x38] sm:$0xff]
        %v171 = vld [vmem:[%s142 + $0x40] sm:$0xff]
        %v172 = vld [vmem:[%s142 + $0x48] sm:$0xff]
        %v173 = vld [vmem:[%s142 + $0x50] sm:$0xff]
        %v174 = vld [vmem:[%s142 + $0x58] sm:$0xff]
        %v175 = vld [vmem:[%s142 + $0x60] sm:$0xff]
        %v176 = vld [vmem:[%s142 + $0x68] sm:$0xff]
        %v177 = vld [vmem:[%s142 + $0x70] sm:$0xff]
        %v178 = vld [vmem:[%s142 + $0x78] sm:$0xff]
        %179 = vmatprep.subr.mxu0 0.0
        %180 = vmatpush1.xpose.msra.mxu0 0.0
        %181 = vmatprep.subr.mxu0 0.0
        %182 = vmatpush1.xpose.msra.mxu0 0.0
        %183 = vmatprep.subr.mxu0 0.0
        %184 = vmatpush1.xpose.msra.mxu0 0.0
        %185 = vmatprep.subr.mxu0 0.0
        %186 = vmatpush1.xpose.msra.mxu0 0.0
        %187 = vmatprep.subr.mxu0 0.0
        %188 = vmatpush1.xpose.msra.mxu0 0.0
        %189 = vmatprep.subr.mxu0 0.0
        %190 = vmatpush1.xpose.msra.mxu0 0.0
        %191 = vmatprep.subr.mxu0 0.0
        %192 = vmatpush1.xpose.msra.mxu0 0.0
        %193 = vmatprep.subr.mxu0 0.0
        %194 = vmatpush1.xpose.msra.mxu0 0.0
        %195 = vmatprep.subr.mxu0 %v178
        %196 = vmatpush1.xpose.msra.mxu0 %v177
        %197 = vmatprep.subr.mxu0 %v176
        %198 = vmatpush1.xpose.msra.mxu0 %v175
        %199 = vmatprep.subr.mxu0 %v174
        %200 = vmatpush1.xpose.msra.mxu0 %v173
        %201 = vmatprep.subr.mxu0 %v172
        %202 = vmatpush1.xpose.msra.mxu0 %v171
        %203 = vmatprep.subr.mxu0 %v170
        %204 = vmatpush1.xpose.msra.mxu0 %v169
        %205 = vmatprep.subr.mxu0 %v168
        %206 = vmatpush1.xpose.msra.mxu0 %v167
        %207 = vmatprep.subr.mxu0 %v166
        %208 = vmatpush1.xpose.msra.mxu0 %v165
        %209 = vmatprep.subr.mxu0 %v164
        %210 = vmatpush1.xpose.msra.mxu0 %v163
        %211 = vmatprep.subr.mxu0 0.0
        %212 = vmatpush2.xpose.msra.mxu0 0.0
        %213 = vmatprep.subr.mxu0 0.0
        %214 = vmatpush2.xpose.msra.mxu0 0.0
        %215 = vmatprep.subr.mxu0 0.0
        %216 = vmatpush2.xpose.msra.mxu0 0.0
        %217 = vmatprep.subr.mxu0 0.0
        %218 = vmatpush2.xpose.msra.mxu0 0.0
        %219 = vmatprep.subr.mxu0 0.0
        %220 = vmatpush2.xpose.msra.mxu0 0.0
        %221 = vmatprep.subr.mxu0 0.0
        %222 = vmatpush2.xpose.msra.mxu0 0.0
        %223 = vmatprep.subr.mxu0 0.0
        %224 = vmatpush2.xpose.msra.mxu0 0.0
        %225 = vmatprep.subr.mxu0 0.0
        %226 = vmatpush2.xpose.msra.mxu0 0.0
        %227 = vmatprep.subr.mxu0 0.0
        %228 = vmatpush2.xpose.msra.mxu0 0.0
        %229 = vmatprep.subr.mxu0 0.0
        %230 = vmatpush2.xpose.msra.mxu0 0.0
        %231 = vmatprep.subr.mxu0 0.0
        %232 = vmatpush2.xpose.msra.mxu0 0.0
        %233 = vmatprep.subr.mxu0 0.0
        %234 = vmatpush2.xpose.msra.mxu0 0.0
        %235 = vmatprep.subr.mxu0 0.0
        %236 = vmatpush2.xpose.msra.mxu0 0.0
        %237 = vmatprep.subr.mxu0 0.0
        %238 = vmatpush2.xpose.msra.mxu0 0.0
        %239 = vmatprep.subr.mxu0 0.0
        %240 = vmatpush2.xpose.msra.mxu0 0.0
        %241 = vmatprep.subr.mxu0 0.0
        %242 = vmatpush2.xpose.msra.mxu0 0.0
        %243 = vmatprep.mubr.f32.mxu0 %v164
        %244 = vmatmul.mubr.f32.gmra.mxu0 %v163
        %v245 = vpop.f32.mrf.mxu0
        %v246 = vadd.f32 0.0, %v245
        %v247 = vpop.f32.mrf.mxu0
        %248 = vmatprep.mubr.f32.mxu0 %v166
        %249 = vmatmul.mubr.f32.gmra.mxu0 %v165
        %v250 = vpop.f32.mrf.mxu0
        %v251 = vadd.f32 0.0, %v250
        %v252 = vpop.f32.mrf.mxu0
        %253 = vmatprep.mubr.f32.mxu0 %v168
        %254 = vmatmul.mubr.f32.gmra.mxu0 %v167
        %v255 = vpop.f32.mrf.mxu0
        %v256 = vadd.f32 0.0, %v255
        %v257 = vpop.f32.mrf.mxu0
        %258 = vmatprep.mubr.f32.mxu0 %v170
        %259 = vmatmul.mubr.f32.gmra.mxu0 %v169
        %v260 = vpop.f32.mrf.mxu0
        %v261 = vadd.f32 0.0, %v260
        %v262 = vpop.f32.mrf.mxu0
        %263 = vmatprep.mubr.f32.mxu0 %v172
        %264 = vmatmul.mubr.f32.gmra.mxu0 %v171
        %v265 = vpop.f32.mrf.mxu0
        %v266 = vadd.f32 0.0, %v265
        %v267 = vpop.f32.mrf.mxu0
        %268 = vmatprep.mubr.f32.mxu0 %v174
        %269 = vmatmul.mubr.f32.gmra.mxu0 %v173
        %v270 = vpop.f32.mrf.mxu0
        %v271 = vadd.f32 0.0, %v270
        %v272 = vpop.f32.mrf.mxu0
        %273 = vmatprep.mubr.f32.mxu0 %v176
        %274 = vmatmul.mubr.f32.gmra.mxu0 %v175
        %v275 = vpop.f32.mrf.mxu0
        %v276 = vadd.f32 0.0, %v275
        %v277 = vpop.f32.mrf.mxu0
        %278 = vmatprep.mubr.f32.mxu0 %v178
        %279 = vmatmul.mubr.f32.gmra.mxu0 %v177
        %v280 = vpop.f32.mrf.mxu0
        %v281 = vadd.f32 0.0, %v280
        %v282 = vpop.f32.mrf.mxu0
        %283 = vdwg.mxu0
        %vm284 = vcmask 523264
        %v285 = vsel %vm284, %v246, inf
        %286 = vmin.xlane.f32.xlu0 %v285
        %v287 = vpop.xlane.xlu0 %286
        %v288 = vsel %vm284, %v251, inf
        %289 = vmin.xlane.f32.xlu0 %v288
        %v290 = vpop.xlane.xlu0 %289
        %v291 = vsel %vm284, %v256, inf
        %292 = vmin.xlane.f32.xlu0 %v291
        %v293 = vpop.xlane.xlu0 %292
        %v294 = vsel %vm284, %v261, inf
        %295 = vmin.xlane.f32.xlu0 %v294
        %v296 = vpop.xlane.xlu0 %295
        %v297 = vsel %vm284, %v266, inf
        %298 = vmin.xlane.f32.xlu0 %v297
        %v299 = vpop.xlane.xlu0 %298
        %v300 = vsel %vm284, %v271, inf
        %301 = vmin.xlane.f32.xlu0 %v300
        %v302 = vpop.xlane.xlu0 %301
        %v303 = vsel %vm284, %v276, inf
        %304 = vmin.xlane.f32.xlu0 %v303
        %v305 = vpop.xlane.xlu0 %304
        %v306 = vsel %vm284, %v281, inf
        %307 = vmin.xlane.f32.xlu0 %v306
        %v308 = vpop.xlane.xlu0 %307
        %v309 = vsub.f32 %v287, %v246
        %v310 = vsub.f32 %v290, %v251
        %v311 = vsub.f32 %v293, %v256
        %v312 = vsub.f32 %v296, %v261
        %v313 = vsub.f32 %v299, %v266
        %v314 = vsub.f32 %v302, %v271
        %v315 = vsub.f32 %v305, %v276
        %v316 = vsub.f32 %v308, %v281
        %v317 = vmul.f32 %v309, 1.442695
        %v318 = vpow.pop %v317
        %v319 = vmul.f32 %v310, 1.442695
        %v320 = vpow.pop %v319
        %v321 = vmul.f32 %v311, 1.442695
        %v322 = vpow.pop %v321
        %v323 = vmul.f32 %v312, 1.442695
        %v324 = vpow.pop %v323
        %v325 = vmul.f32 %v313, 1.442695
        %v326 = vpow.pop %v325
        %v327 = vmul.f32 %v314, 1.442695
        %v328 = vpow.pop %v327
        %v329 = vmul.f32 %v315, 1.442695
        %v330 = vpow.pop %v329
        %v331 = vmul.f32 %v316, 1.442695
        %v332 = vpow.pop %v331
        %v333 = vsel %vm284, %v318, 0.0
        %334 = vadd.xlane.f32.xlu0 %v333
        %v335 = vpop.xlane.xlu0 %334
        %v336 = vsel %vm284, %v320, 0.0
        %337 = vadd.xlane.f32.xlu0 %v336
        %v338 = vpop.xlane.xlu0 %337
        %v339 = vsel %vm284, %v322, 0.0
        %340 = vadd.xlane.f32.xlu0 %v339
        %v341 = vpop.xlane.xlu0 %340
        %v342 = vsel %vm284, %v324, 0.0
        %343 = vadd.xlane.f32.xlu0 %v342
        %v344 = vpop.xlane.xlu0 %343
        %v345 = vsel %vm284, %v326, 0.0
        %346 = vadd.xlane.f32.xlu0 %v345
        %v347 = vpop.xlane.xlu0 %346
        %v348 = vsel %vm284, %v328, 0.0
        %349 = vadd.xlane.f32.xlu0 %v348
        %v350 = vpop.xlane.xlu0 %349
        %v351 = vsel %vm284, %v330, 0.0
        %352 = vadd.xlane.f32.xlu0 %v351
        %v353 = vpop.xlane.xlu0 %352
        %v354 = vsel %vm284, %v332, 0.0
        %355 = vadd.xlane.f32.xlu0 %v354
        %v356 = vpop.xlane.xlu0 %355
        %v357 = vrcp.pop %v335
        %v358 = vrcp.pop %v338
        %v359 = vrcp.pop %v341
        %v360 = vrcp.pop %v344
        %v361 = vrcp.pop %v347
        %v362 = vrcp.pop %v350
        %v363 = vrcp.pop %v353
        %v364 = vrcp.pop %v356
        %v365 = vmul.f32 %v318, %v357
        %v366 = vmul.f32 %v320, %v358
        %v367 = vmul.f32 %v322, %v359
        %v368 = vmul.f32 %v324, %v360
        %v369 = vmul.f32 %v326, %v361
        %v370 = vmul.f32 %v328, %v362
        %v371 = vmul.f32 %v330, %v363
        %v372 = vmul.f32 %v332, %v364
        %v374 = vsel %vm284, %v365, 0
        %v377 = vsel %vm284, %v366, 0
        %v380 = vsel %vm284, %v367, 0
        %v383 = vsel %vm284, %v368, 0
        %v386 = vsel %vm284, %v369, 0
        %v389 = vsel %vm284, %v370, 0
        %v392 = vsel %vm284, %v371, 0
        %v395 = vsel %vm284, %v372, 0
        %397 = vmatprep.subr.mxu0 0.0
        %398 = vmatpush1.msra.mxu0 0.0
        %399 = vmatprep.subr.mxu0 0.0
        %400 = vmatpush1.msra.mxu0 0.0
        %401 = vmatprep.subr.mxu0 0.0
        %402 = vmatpush1.msra.mxu0 0.0
        %403 = vmatprep.subr.mxu0 0.0
        %404 = vmatpush1.msra.mxu0 0.0
        %405 = vmatprep.subr.mxu0 0.0
        %406 = vmatpush1.msra.mxu0 0.0
        %407 = vmatprep.subr.mxu0 0.0
        %408 = vmatpush1.msra.mxu0 0.0
        %409 = vmatprep.subr.mxu0 0.0
        %410 = vmatpush1.msra.mxu0 0.0
        %411 = vmatprep.subr.mxu0 0.0
        %412 = vmatpush1.msra.mxu0 0.0
        %413 = vmatprep.subr.mxu0 %v178
        %414 = vmatpush1.msra.mxu0 %v177
        %415 = vmatprep.subr.mxu0 %v176
        %416 = vmatpush1.msra.mxu0 %v175
        %417 = vmatprep.subr.mxu0 %v174
        %418 = vmatpush1.msra.mxu0 %v173
        %419 = vmatprep.subr.mxu0 %v172
        %420 = vmatpush1.msra.mxu0 %v171
        %421 = vmatprep.subr.mxu0 %v170
        %422 = vmatpush1.msra.mxu0 %v169
        %423 = vmatprep.subr.mxu0 %v168
        %424 = vmatpush1.msra.mxu0 %v167
        %425 = vmatprep.subr.mxu0 %v166
        %426 = vmatpush1.msra.mxu0 %v165
        %427 = vmatprep.subr.mxu0 %v164
        %428 = vmatpush1.msra.mxu0 %v163
        %429 = vmatprep.subr.mxu0 0.0
        %430 = vmatpush2.msra.mxu0 0.0
        %431 = vmatprep.subr.mxu0 0.0
        %432 = vmatpush2.msra.mxu0 0.0
        %433 = vmatprep.subr.mxu0 0.0
        %434 = vmatpush2.msra.mxu0 0.0
        %435 = vmatprep.subr.mxu0 0.0
        %436 = vmatpush2.msra.mxu0 0.0
        %437 = vmatprep.subr.mxu0 0.0
        %438 = vmatpush2.msra.mxu0 0.0
        %439 = vmatprep.subr.mxu0 0.0
        %440 = vmatpush2.msra.mxu0 0.0
        %441 = vmatprep.subr.mxu0 0.0
        %442 = vmatpush2.msra.mxu0 0.0
        %443 = vmatprep.subr.mxu0 0.0
        %444 = vmatpush2.msra.mxu0 0.0
        %445 = vmatprep.subr.mxu0 0.0
        %446 = vmatpush2.msra.mxu0 0.0
        %447 = vmatprep.subr.mxu0 0.0
        %448 = vmatpush2.msra.mxu0 0.0
        %449 = vmatprep.subr.mxu0 0.0
        %450 = vmatpush2.msra.mxu0 0.0
        %451 = vmatprep.subr.mxu0 0.0
        %452 = vmatpush2.msra.mxu0 0.0
        %453 = vmatprep.subr.mxu0 0.0
        %454 = vmatpush2.msra.mxu0 0.0
        %455 = vmatprep.subr.mxu0 0.0
        %456 = vmatpush2.msra.mxu0 0.0
        %457 = vmatprep.subr.mxu0 0.0
        %458 = vmatpush2.msra.mxu0 0.0
        %459 = vmatprep.subr.mxu0 0.0
        %460 = vmatpush2.msra.mxu0 0.0
        %461 = vmatprep.mubr.f32.mxu0 0.0
        %462 = vmatmul.mubr.f32.gmra.mxu0 %v374
        %v463 = vpop.f32.mrf.mxu0
        %v464 = vadd.f32 0.0, %v463
        %v465 = vpop.f32.mrf.mxu0
        %v466 = vadd.f32 0.0, %v465
        %467 = vmatprep.mubr.f32.mxu0 0.0
        %468 = vmatmul.mubr.f32.gmra.mxu0 %v377
        %v469 = vpop.f32.mrf.mxu0
        %v470 = vadd.f32 0.0, %v469
        %v471 = vpop.f32.mrf.mxu0
        %v472 = vadd.f32 0.0, %v471
        %473 = vmatprep.mubr.f32.mxu0 0.0
        %474 = vmatmul.mubr.f32.gmra.mxu0 %v380
        %v475 = vpop.f32.mrf.mxu0
        %v476 = vadd.f32 0.0, %v475
        %v477 = vpop.f32.mrf.mxu0
        %v478 = vadd.f32 0.0, %v477
        %479 = vmatprep.mubr.f32.mxu0 0.0
        %480 = vmatmul.mubr.f32.gmra.mxu0 %v383
        %v481 = vpop.f32.mrf.mxu0
        %v482 = vadd.f32 0.0, %v481
        %v483 = vpop.f32.mrf.mxu0
        %v484 = vadd.f32 0.0, %v483
        %485 = vmatprep.mubr.f32.mxu0 0.0
        %486 = vmatmul.mubr.f32.gmra.mxu0 %v386
        %v487 = vpop.f32.mrf.mxu0
        %v488 = vadd.f32 0.0, %v487
        %v489 = vpop.f32.mrf.mxu0
        %v490 = vadd.f32 0.0, %v489
        %491 = vmatprep.mubr.f32.mxu0 0.0
        %492 = vmatmul.mubr.f32.gmra.mxu0 %v389
        %v493 = vpop.f32.mrf.mxu0
        %v494 = vadd.f32 0.0, %v493
        %v495 = vpop.f32.mrf.mxu0
        %v496 = vadd.f32 0.0, %v495
        %497 = vmatprep.mubr.f32.mxu0 0.0
        %498 = vmatmul.mubr.f32.gmra.mxu0 %v392
        %v499 = vpop.f32.mrf.mxu0
        %v500 = vadd.f32 0.0, %v499
        %v501 = vpop.f32.mrf.mxu0
        %v502 = vadd.f32 0.0, %v501
        %503 = vmatprep.mubr.f32.mxu0 0.0
        %504 = vmatmul.mubr.f32.gmra.mxu0 %v395
        %v505 = vpop.f32.mrf.mxu0
        %v506 = vadd.f32 0.0, %v505
        %v507 = vpop.f32.mrf.mxu0
        %v508 = vadd.f32 0.0, %v507
        %509 = vdwg.mxu0
        %s510 = sld [smem:[#allocation2]]
        %v511 = vstv %s510
        %v512 = vmul.f32 %v511, %v464
        %v513 = vmul.f32 %v511, %v466
        %v514 = vmul.f32 %v511, %v470
        %v515 = vmul.f32 %v511, %v472
        %v516 = vmul.f32 %v511, %v476
        %v517 = vmul.f32 %v511, %v478
        %v518 = vmul.f32 %v511, %v482
        %v519 = vmul.f32 %v511, %v484
        %v520 = vmul.f32 %v511, %v488
        %v521 = vmul.f32 %v511, %v490
        %v522 = vmul.f32 %v511, %v494
        %v523 = vmul.f32 %v511, %v496
        %v524 = vmul.f32 %v511, %v500
        %v525 = vmul.f32 %v511, %v502
        %v526 = vmul.f32 %v511, %v506
        %v527 = vmul.f32 %v511, %v508
        %v528 = vadd.f32 %v512, %v163
        %v529 = vadd.f32 %v513, %v164
        %v530 = vadd.f32 %v514, %v165
        %v531 = vadd.f32 %v515, %v166
        %v532 = vadd.f32 %v516, %v167
        %v533 = vadd.f32 %v517, %v168
        %v534 = vadd.f32 %v518, %v169
        %v535 = vadd.f32 %v519, %v170
        %v536 = vadd.f32 %v520, %v171
        %v537 = vadd.f32 %v521, %v172
        %v538 = vadd.f32 %v522, %v173
        %v539 = vadd.f32 %v523, %v174
        %v540 = vadd.f32 %v524, %v175
        %v541 = vadd.f32 %v525, %v176
        %v542 = vadd.f32 %v526, %v177
        %v543 = vadd.f32 %v527, %v178
        %544 = vst [vmem:[%s162] sm:$0xff] %v528
        %545 = vst [vmem:[%s162 + $0x8] sm:$0xff] %v529
        %546 = vst [vmem:[%s162 + $0x10] sm:$0xff] %v530
        %547 = vst [vmem:[%s162 + $0x18] sm:$0xff] %v531
        %548 = vst [vmem:[%s162 + $0x20] sm:$0xff] %v532
        %549 = vst [vmem:[%s162 + $0x28] sm:$0xff] %v533
        %550 = vst [vmem:[%s162 + $0x30] sm:$0xff] %v534
        %551 = vst [vmem:[%s162 + $0x38] sm:$0xff] %v535
        %552 = vst [vmem:[%s162 + $0x40] sm:$0xff] %v536
        %553 = vst [vmem:[%s162 + $0x48] sm:$0xff] %v537
        %554 = vst [vmem:[%s162 + $0x50] sm:$0xff] %v538
        %555 = vst [vmem:[%s162 + $0x58] sm:$0xff] %v539
        %556 = vst [vmem:[%s162 + $0x60] sm:$0xff] %v540
        %557 = vst [vmem:[%s162 + $0x68] sm:$0xff] %v541
        %558 = vst [vmem:[%s162 + $0x70] sm:$0xff] %v542
        %559 = vst [vmem:[%s162 + $0x78] sm:$0xff] %v543
        %s560 = sand.u32 %s75, 1
        %s561 = scalar_lea.sflag [#allocation5], %s560
        %s562 = sand.u32 %s75, 1
        %s563 = smul.addr %s562, 128
        %s564 = scalar_lea.vmem [#allocation6], %s563
        // Predicated region
        $region33: #{tpu_custom_call.1} parent=27 // pred_check
          %p565 = pneg %p85
        $region34: #{tpu_custom_call.1} parent=27 // pred_check_branch
          %567 = sbr.rel (%p565) target = $region36
        $region35: #{tpu_custom_call.1} parent=27 // pred_region
          %s569 = ssub.s32 2048, 2048
          %570 = vsyncadd %s561, %s569
          %s571 = smul.addr %s20, 16
          %s572 = smul.addr %s571, 128
          %s573 = scalar_lea.hbm %s2, %s572
          %s574 = sshll.u32 %s564, 4
          %s575 = int_to_ptr.vmem [resolvable:$true] %s574
          %580 = dma.vmem_to_hbm [thread:$0]  %s575, 2048, %s573, %s561, 256, 256, 16
        $region36: #{tpu_custom_call.1} parent=27 // pred_fallthru
          _
      $region28: #{tpu_custom_call.1} parent=5 // pred_fallthru
        _
      %p581 = scmp.le.s32.totalorder 2, %s15
      // Predicated region
      $region37: #{tpu_custom_call.1} parent=5 // pred_check
        %p582 = pneg %p581
      $region38: #{tpu_custom_call.1} parent=5 // pred_check_branch
        %584 = sbr.rel (%p582) target = $region40
      $region39: #{tpu_custom_call.1} parent=5 // pred_region
        %s585 = ssub.s32 %s15, 2
        // Predicated region
        $region41: #{tpu_custom_call.1} parent=39 // pred_check
          %p586 = pneg %p91
        $region42: #{tpu_custom_call.1} parent=39 // pred_check_branch
          %588 = sbr.rel (%p586) target = $region44
        $region43: #{tpu_custom_call.1} parent=39 // pred_region
          %s589 = sand.u32 %s76, 1
          %s590 = scalar_lea.sflag [#allocation5], %s589
          %s591 = sand.u32 %s76, 1
          %s592 = smul.addr %s591, 128
          %s593 = scalar_lea.vmem [#allocation6], %s592
          %594 = dma.done %s590, 2048
        $region44: #{tpu_custom_call.1} parent=39 // pred_fallthru
          _
      $region40: #{tpu_custom_call.1} parent=5 // pred_fallthru
        _
    $region6: #{tpu_custom_call.1} parent=1 // loop_footer
      %s19 = sadd.s32 1, %s15
    $region7: #{tpu_custom_call.1} parent=1 // loop_footer_branch
      %14 = sbr.rel target = $region3
    $region8: #{tpu_custom_call.1} parent=1 // loop_exit
      _
    %595 = vsyncpa [#allocation4], 1
    %s596 = scalar_lea.sflag [#allocation4], 1
    %597 = vsyncpa %s596, 1
    %598 = vsyncpa [#allocation5], 1
    %s599 = scalar_lea.sflag [#allocation5], 1
    %600 = vsyncpa %s599, 1

</llo_original>
